<compile_context>
chip_gen: v7x
topology: tpu7x:2x2x1
jax: 0.10.0
libtpu: 0.0.40
codegen_flags: <defaults>
</compile_context>

<pallas_src>
import jax
import jax.numpy as jnp
from jax.experimental import pallas as pl
from jax.experimental.pallas import tpu as pltpu

BN_EPS = 1e-5
_SUBLANE = 16                      # bf16 packs 16 rows/vreg (also satisfies f32's 8)
_VMEM_TILE_BUDGET = 24 << 20       # cap per-tile footprint (safe on v7x 64 MiB VMEM)
_DEFAULT_SCOPED_VMEM = 12 << 20    # below this, don't touch vmem_limit_bytes


def _round_up(n, m):
    return ((n + m - 1) // m) * m


def _bird_dnn_kernel(x_ref, w1_ref, b1_ref, w2_ref, b2_ref, w3_ref, b3_ref,
                     out_ref):
    """Fused MLP hot path (BN pre-folded): (dot+bias+ReLU)x2 -> dot+bias.

    x / w* are bf16 (native MXU); accumulation + biases + output are f32.
    """
    x = x_ref[...]
    h = jnp.dot(x, w1_ref[...], preferred_element_type=jnp.float32) + b1_ref[...]
    h = jnp.maximum(h, 0.0).astype(jnp.bfloat16)
    h = jnp.dot(h, w2_ref[...], preferred_element_type=jnp.float32) + b2_ref[...]
    h = jnp.maximum(h, 0.0).astype(jnp.bfloat16)
    out = jnp.dot(h, w3_ref[...], preferred_element_type=jnp.float32) + b3_ref[...]
    out_ref[...] = out.astype(out_ref.dtype)


def fold_bn_into_linear(params, *, compute_dtype=jnp.bfloat16):
    """Fold eval-mode BatchNorm1d into the preceding Linear (host-side, once).

    Weights are emitted in `compute_dtype` (bf16 -> native MXU path, halves
    HBM traffic); biases stay f32 (added post-accumulation in the kernel).
    """
    s1 = params["g1"] * jax.lax.rsqrt(params["v1"] + BN_EPS)        # (1, H1)
    w1f = (params["w1"] * s1).astype(compute_dtype)                  # (D, H1)
    b1f = ((params["b1"] - params["m1"]) * s1 + params["be1"]).astype(jnp.float32)

    s2 = params["g2"] * jax.lax.rsqrt(params["v2"] + BN_EPS)         # (1, H2)
    w2f = (params["w2"] * s2).astype(compute_dtype)                  # (H1, H2)
    b2f = ((params["b2"] - params["m2"]) * s2 + params["be2"]).astype(jnp.float32)

    return dict(w1=w1f, b1=b1f, w2=w2f, b2=b2f,
                w3=params["w3"].astype(compute_dtype),
                b3=params["b3"].astype(jnp.float32))


def _tensorcores_per_chip():
    """Best-effort TensorCore count per chip (v7x = 2, v5e/v6e = 1)."""
    try:
        info = pltpu.get_tpu_info()
        for attr in ("num_cores", "core_count", "num_tensorcores",
                     "tensorcores_per_chip", "cores_per_chip"):
            v = getattr(info, attr, None)
            if isinstance(v, int) and v > 0:
                return v
    except Exception:
        pass
    try:
        kind = jax.devices()[0].device_kind.lower()
        if "v7" in kind:
            return 2
    except Exception:
        pass
    return 1


def _vmem_per_row_bytes(d_in, h1, h2, c):
    """Lane-padded per-row VMEM footprint of one batch tile.

    bf16 x + f32 out are double-buffered by the pipeline; f32 intermediates
    (h1/h2) are single-buffered scratch-like temporaries.
    """
    lane = lambda n: _round_up(n, 128)
    return (2 * lane(d_in) * 2      # x, bf16, double-buffered
            + 2 * lane(c) * 4       # out, f32, double-buffered
            + lane(h1) * 4          # intermediate h1, f32
            + lane(h2) * 4)         # intermediate h2, f32


def _choose_batch_tile(B, batch_tile, per_row_bytes, n_tc):
    """batch_tile is the cap; amortize step overhead; split only if >=2 TCs."""
    batch_tile = max(_SUBLANE, (batch_tile // _SUBLANE) * _SUBLANE)
    b_full = _round_up(max(B, 1), _SUBLANE)
    vmem_cap = max(_SUBLANE,
                   (_VMEM_TILE_BUDGET // per_row_bytes) // _SUBLANE * _SUBLANE)
    cap = min(batch_tile, vmem_cap)
    if n_tc >= 2 and b_full > _SUBLANE:
        # Keep >= n_tc grid steps so megacore sharding has work on each core.
        per_core = _round_up(pl.cdiv(b_full, n_tc), _SUBLANE)
        tb = min(cap, per_core)
    else:
        # Single TC: the grid is a serial loop; use one full-batch tile if it fits.
        tb = min(cap, b_full)
    return max(_SUBLANE, tb)


def bird_dnn_forward(x, folded, *, batch_tile=4096):
    """Run the fused (BN-folded) BirdDNN forward pass via pallas_call.

    x: (B, input_dim) float (any B; ragged batches are padded internally)
    folded: dict from fold_bn_into_linear().
    """
    B, D_in = x.shape
    H1 = folded["w1"].shape[1]
    H2 = folded["w2"].shape[1]
    C = folded["w3"].shape[1]

    x = x.astype(folded["w1"].dtype)   # bf16 x-stream (dominant HBM traffic)

    per_row = _vmem_per_row_bytes(D_in, H1, H2, C)
    n_tc = _tensorcores_per_chip()
    tb = _choose_batch_tile(B, batch_tile, per_row, n_tc)

    Bp = _round_up(B, tb)
    if Bp != B:
        x = jnp.pad(x, ((0, Bp - B), (0, 0)))   # zero rows; sliced off below
    grid = (Bp // tb,)

    def full_spec(shape):
        # Constant block index -> Pallas elides re-DMA of these tiny slabs.
        return pl.BlockSpec(shape, lambda i: (0, 0))

    in_specs = [
        pl.BlockSpec((tb, D_in), lambda i: (i, 0)),   # x batch tile (bf16)
        full_spec((D_in, H1)), full_spec((1, H1)),    # folded w1 (bf16), b1 (f32)
        full_spec((H1, H2)), full_spec((1, H2)),      # folded w2 (bf16), b2 (f32)
        full_spec((H2, C)), full_spec((1, C)),        # w3 (bf16), b3 (f32)
    ]
    out_spec = pl.BlockSpec((tb, C), lambda i: (i, 0))

    cp_kwargs = dict(dimension_semantics=("parallel",))
    vmem_need = tb * per_row + (2 << 20)              # + weights/biases + slack
    if vmem_need > _DEFAULT_SCOPED_VMEM:
        # Raise scoped VMEM (v5e default is 16 MiB); stays well under v7x's
        # 64 MiB physical VMEM because the tile is budgeted to <= 24 MiB.
        cp_kwargs["vmem_limit_bytes"] = 32 << 20

    fn = pl.pallas_call(
        _bird_dnn_kernel,
        out_shape=jax.ShapeDtypeStruct((Bp, C), jnp.float32),
        grid_spec=pltpu.PrefetchScalarGridSpec(
            num_scalar_prefetch=0,
            grid=grid,
            in_specs=in_specs,
            out_specs=out_spec,
        ),
        compiler_params=pltpu.CompilerParams(**cp_kwargs),
    )

    out = fn(x, folded["w1"], folded["b1"], folded["w2"], folded["b2"],
             folded["w3"], folded["b3"])
    return out[:B]


def init_params(key, input_dim, num_classes, hidden_layers=(64, 32)):
    """Deterministic synthetic parameters matching BirdDNN's shapes (raw, un-folded)."""
    h1, h2 = hidden_layers
    keys = jax.random.split(key, 14)

    def linear(kw, kb, fan_in, fan_out):
        bound = 1.0 / jnp.sqrt(jnp.float32(fan_in))
        w = jax.random.uniform(kw, (fan_in, fan_out), jnp.float32, -bound, bound)
        b = jax.random.uniform(kb, (1, fan_out), jnp.float32, -bound, bound)
        return w, b

    w1, b1 = linear(keys[0], keys[1], input_dim, h1)
    w2, b2 = linear(keys[2], keys[3], h1, h2)
    w3, b3 = linear(keys[4], keys[5], h2, num_classes)

    # Non-trivial BatchNorm parameters / running stats (independent keys).
    g1 = 1.0 + 0.1 * jax.random.normal(keys[6], (1, h1), jnp.float32)
    be1 = 0.1 * jax.random.normal(keys[7], (1, h1), jnp.float32)
    m1 = 0.1 * jax.random.normal(keys[8], (1, h1), jnp.float32)
    v1 = 1.0 + 0.1 * jax.random.uniform(keys[9], (1, h1), jnp.float32)

    g2 = 1.0 + 0.1 * jax.random.normal(keys[10], (1, h2), jnp.float32)
    be2 = 0.1 * jax.random.normal(keys[11], (1, h2), jnp.float32)
    m2 = 0.1 * jax.random.normal(keys[12], (1, h2), jnp.float32)
    v2 = 1.0 + 0.1 * jax.random.uniform(keys[13], (1, h2), jnp.float32)

    return dict(
        w1=w1, b1=b1, g1=g1, be1=be1, m1=m1, v1=v1,
        w2=w2, b2=b2, g2=g2, be2=be2, m2=m2, v2=v2,
        w3=w3, b3=b3,
    )


def reference_forward(x, p):
    """Pure-JAX f32 reference (un-folded eval-mode BirdDNN) for a correctness check."""
    h = x @ p["w1"] + p["b1"]
    h = (h - p["m1"]) * jax.lax.rsqrt(p["v1"] + BN_EPS) * p["g1"] + p["be1"]
    h = jnp.maximum(h, 0.0)
    h = h @ p["w2"] + p["b2"]
    h = (h - p["m2"]) * jax.lax.rsqrt(p["v2"] + BN_EPS) * p["g2"] + p["be2"]
    h = jnp.maximum(h, 0.0)
    return h @ p["w3"] + p["b3"]


if __name__ == "__main__":
    key = jax.random.PRNGKey(0)
    k_x, k_p = jax.random.split(key)

    # Small shapes consistent with the module: features-only MLP input.
    # Batch is intentionally ragged (not a multiple of 8/16) to exercise padding.
    batch = 50
    input_dim = 40
    hidden_layers = (64, 32)
    num_classes = 10

    x = jax.random.normal(k_x, (batch, input_dim), jnp.float32)
    params = init_params(k_p, input_dim, num_classes, hidden_layers)
    folded = fold_bn_into_linear(params)            # bf16 weights, f32 biases

    out = bird_dnn_forward(x, folded)
    out = jax.block_until_ready(out)

    ref = reference_forward(x, params)              # f32 reference
    assert out.shape == (batch, num_classes)
    # bf16 compute path vs f32 reference: loosened tolerance (bf16 ~3 decimal digits).
    assert jnp.allclose(out, ref, atol=5e-2, rtol=5e-2), "mismatch vs reference"

    print("KERNEL_OK")
</pallas_src>

<mosaic_0001>
module attributes {stable_mosaic.version = 11 : i64} {
  func.func @_bird_dnn_kernel(%arg0: i32, %arg1: memref<64x40xbf16, #tpu.memory_space<vmem>>, %arg2: memref<40x64xbf16, #tpu.memory_space<vmem>>, %arg3: memref<1x64xf32, #tpu.memory_space<vmem>>, %arg4: memref<64x32xbf16, #tpu.memory_space<vmem>>, %arg5: memref<1x32xf32, #tpu.memory_space<vmem>>, %arg6: memref<32x10xbf16, #tpu.memory_space<vmem>>, %arg7: memref<1x10xf32, #tpu.memory_space<vmem>>, %arg8: memref<64x10xf32, #tpu.memory_space<vmem>>) attributes {dimension_semantics = [#tpu.dimension_semantics<parallel>], iteration_bounds = array<i64: 1>, scalar_prefetch = 0 : i64, scratch_operands = 0 : i64, tpu.core_type = #tpu.core_type<tc>, window_params = [{transform_indices = @transform_0, window_bounds = array<i64: 64, 40>}, {pipeline_mode = #tpu.pipeline_mode<synchronous>, transform_indices = @transform_1, window_bounds = array<i64: 40, 64>}, {pipeline_mode = #tpu.pipeline_mode<synchronous>, transform_indices = @transform_2, window_bounds = array<i64: 1, 64>}, {pipeline_mode = #tpu.pipeline_mode<synchronous>, transform_indices = @transform_3, window_bounds = array<i64: 64, 32>}, {pipeline_mode = #tpu.pipeline_mode<synchronous>, transform_indices = @transform_4, window_bounds = array<i64: 1, 32>}, {pipeline_mode = #tpu.pipeline_mode<synchronous>, transform_indices = @transform_5, window_bounds = array<i64: 32, 10>}, {pipeline_mode = #tpu.pipeline_mode<synchronous>, transform_indices = @transform_6, window_bounds = array<i64: 1, 10>}, {transform_indices = @transform_7, window_bounds = array<i64: 64, 10>}]} {
    %c0 = arith.constant 0 : index
    %c0_0 = arith.constant 0 : index
    %0 = vector.load %arg1[%c0, %c0_0] : memref<64x40xbf16, #tpu.memory_space<vmem>>, vector<64x40xbf16>
    %c0_1 = arith.constant 0 : index
    %c0_2 = arith.constant 0 : index
    %1 = vector.load %arg2[%c0_1, %c0_2] : memref<40x64xbf16, #tpu.memory_space<vmem>>, vector<40x64xbf16>
    %cst = arith.constant dense<0.000000e+00> : vector<64x64xf32>
    %2 = tpu.matmul %0, %1, %cst {dimension_numbers = #tpu.dot_dimension_numbers<[1], [0], [0], [1], [0, 0, 1, 1], [], []>} : vector<64x40xbf16>, vector<40x64xbf16>, vector<64x64xf32> -> vector<64x64xf32>
    %c0_3 = arith.constant 0 : index
    %c0_4 = arith.constant 0 : index
    %3 = vector.load %arg3[%c0_3, %c0_4] : memref<1x64xf32, #tpu.memory_space<vmem>>, vector<1x64xf32>
    %4 = vector.broadcast %3 : vector<1x64xf32> to vector<64x64xf32>
    %5 = arith.addf %2, %4 : vector<64x64xf32>
    %cst_5 = arith.constant 0.000000e+00 : f32
    %6 = vector.broadcast %cst_5 : f32 to vector<64x64xf32>
    %7 = arith.maximumf %5, %6 : vector<64x64xf32>
    %8 = arith.truncf %7 : vector<64x64xf32> to vector<64x64xbf16>
    %c0_6 = arith.constant 0 : index
    %c0_7 = arith.constant 0 : index
    %9 = vector.load %arg4[%c0_6, %c0_7] : memref<64x32xbf16, #tpu.memory_space<vmem>>, vector<64x32xbf16>
    %cst_8 = arith.constant dense<0.000000e+00> : vector<64x32xf32>
    %10 = tpu.matmul %8, %9, %cst_8 {dimension_numbers = #tpu.dot_dimension_numbers<[1], [0], [0], [1], [0, 0, 1, 1], [], []>} : vector<64x64xbf16>, vector<64x32xbf16>, vector<64x32xf32> -> vector<64x32xf32>
    %c0_9 = arith.constant 0 : index
    %c0_10 = arith.constant 0 : index
    %11 = vector.load %arg5[%c0_9, %c0_10] : memref<1x32xf32, #tpu.memory_space<vmem>>, vector<1x32xf32>
    %12 = vector.broadcast %11 : vector<1x32xf32> to vector<64x32xf32>
    %13 = arith.addf %10, %12 : vector<64x32xf32>
    %cst_11 = arith.constant 0.000000e+00 : f32
    %14 = vector.broadcast %cst_11 : f32 to vector<64x32xf32>
    %15 = arith.maximumf %13, %14 : vector<64x32xf32>
    %16 = arith.truncf %15 : vector<64x32xf32> to vector<64x32xbf16>
    %c0_12 = arith.constant 0 : index
    %c0_13 = arith.constant 0 : index
    %17 = vector.load %arg6[%c0_12, %c0_13] : memref<32x10xbf16, #tpu.memory_space<vmem>>, vector<32x10xbf16>
    %cst_14 = arith.constant dense<0.000000e+00> : vector<64x10xf32>
    %18 = tpu.matmul %16, %17, %cst_14 {dimension_numbers = #tpu.dot_dimension_numbers<[1], [0], [0], [1], [0, 0, 1, 1], [], []>} : vector<64x32xbf16>, vector<32x10xbf16>, vector<64x10xf32> -> vector<64x10xf32>
    %c0_15 = arith.constant 0 : index
    %c0_16 = arith.constant 0 : index
    %19 = vector.load %arg7[%c0_15, %c0_16] : memref<1x10xf32, #tpu.memory_space<vmem>>, vector<1x10xf32>
    %20 = vector.broadcast %19 : vector<1x10xf32> to vector<64x10xf32>
    %21 = arith.addf %18, %20 : vector<64x10xf32>
    %c0_17 = arith.constant 0 : index
    %c0_18 = arith.constant 0 : index
    %22 = vector.load %arg8[%c0_17, %c0_18] : memref<64x10xf32, #tpu.memory_space<vmem>>, vector<64x10xf32>
    tpu.vector_store %arg8[%c0_17, %c0_18], %21 {strides = array<i32>} : memref<64x10xf32, #tpu.memory_space<vmem>>, vector<64x10xf32>,
    return
  }
  func.func @transform_0(%arg0: i32) -> (i32, i32) {
    %c0_i32 = arith.constant 0 : i32
    %c0_i32_0 = arith.constant 0 : i32
    return %arg0, %c0_i32 : i32, i32
  }
  func.func @transform_1(%arg0: i32) -> (i32, i32) {
    %c0_i32 = arith.constant 0 : i32
    %c0_i32_0 = arith.constant 0 : i32
    %c0_i32_1 = arith.constant 0 : i32
    return %c0_i32, %c0_i32_0 : i32, i32
  }
  func.func @transform_2(%arg0: i32) -> (i32, i32) {
    %c0_i32 = arith.constant 0 : i32
    %c0_i32_0 = arith.constant 0 : i32
    %c0_i32_1 = arith.constant 0 : i32
    return %c0_i32, %c0_i32_0 : i32, i32
  }
  func.func @transform_3(%arg0: i32) -> (i32, i32) {
    %c0_i32 = arith.constant 0 : i32
    %c0_i32_0 = arith.constant 0 : i32
    %c0_i32_1 = arith.constant 0 : i32
    return %c0_i32, %c0_i32_0 : i32, i32
  }
  func.func @transform_4(%arg0: i32) -> (i32, i32) {
    %c0_i32 = arith.constant 0 : i32
    %c0_i32_0 = arith.constant 0 : i32
    %c0_i32_1 = arith.constant 0 : i32
    return %c0_i32, %c0_i32_0 : i32, i32
  }
  func.func @transform_5(%arg0: i32) -> (i32, i32) {
    %c0_i32 = arith.constant 0 : i32
    %c0_i32_0 = arith.constant 0 : i32
    %c0_i32_1 = arith.constant 0 : i32
    return %c0_i32, %c0_i32_0 : i32, i32
  }
  func.func @transform_6(%arg0: i32) -> (i32, i32) {
    %c0_i32 = arith.constant 0 : i32
    %c0_i32_0 = arith.constant 0 : i32
    %c0_i32_1 = arith.constant 0 : i32
    return %c0_i32, %c0_i32_0 : i32, i32
  }
  func.func @transform_7(%arg0: i32) -> (i32, i32) {
    %c0_i32 = arith.constant 0 : i32
    %c0_i32_0 = arith.constant 0 : i32
    return %arg0, %c0_i32 : i32, i32
  }
}

</mosaic_0001>

<llo_original>
// kernel: tpu_custom_call.1
$region0: #{tpu_custom_call.1}
  #allocation0 [shape = 'u32[]', space=smem, size = 0x4, offset = 0x4, fixed_abs, tag = 'smem constant byte address 0x4 - core index']
  #allocation1 [shape = 'u32[144,128]{1,0:T(1,128)}', space=vmem, size = 0x12000, scoped, tag = 'internal scratch']
  %s0 = inlined_call_operand.vmem [shape: bf16[64,40], index: 0, kind: input, shape index: {}]
  %s1 = inlined_call_operand.vmem [shape: bf16[40,64], index: 1, kind: input, shape index: {}]
  %s2 = inlined_call_operand.vmem [shape: f32[1,64], index: 2, kind: input, shape index: {}]
  %s3 = inlined_call_operand.vmem [shape: bf16[64,32], index: 3, kind: input, shape index: {}]
  %s4 = inlined_call_operand.vmem [shape: f32[1,32], index: 4, kind: input, shape index: {}]
  %s5 = inlined_call_operand.vmem [shape: bf16[32,10], index: 5, kind: input, shape index: {}]
  %s6 = inlined_call_operand.vmem [shape: f32[1,10], index: 6, kind: input, shape index: {}]
  %s7 = inlined_call_operand.vmem [shape: f32[64,10], index: 7, kind: output, shape index: {}]
  %s8 = sld [smem:[#allocation0]]
  $region38: #{tpu_custom_call.1} parent=0
    _
  %s10 = ssub.s32 1, %s8
  %s11 = scalar_select 0, %s10, %s8
  // Predicated region
  $region2: #{tpu_custom_call.1} parent=0 // pred_check
    _
  $region3: #{tpu_custom_call.1} parent=0 // pred_check_branch
    %13 = sbr.rel (0) target = $region5
  $region4: #{tpu_custom_call.1} parent=0 // pred_region
    _
  $region5: #{tpu_custom_call.1} parent=0 // pred_fallthru
    _
  // Predicated region
  $region6: #{tpu_custom_call.1} parent=0 // pred_check
    _
  $region7: #{tpu_custom_call.1} parent=0 // pred_check_branch
    %15 = sbr.rel (0) target = $region9
  $region8: #{tpu_custom_call.1} parent=0 // pred_region
    _
  $region9: #{tpu_custom_call.1} parent=0 // pred_fallthru
    _
  // Predicated region
  $region10: #{tpu_custom_call.1} parent=0 // pred_check
    _
  $region11: #{tpu_custom_call.1} parent=0 // pred_check_branch
    %17 = sbr.rel (0) target = $region13
  $region12: #{tpu_custom_call.1} parent=0 // pred_region
    _
  $region13: #{tpu_custom_call.1} parent=0 // pred_fallthru
    _
  // Predicated region
  $region14: #{tpu_custom_call.1} parent=0 // pred_check
    _
  $region15: #{tpu_custom_call.1} parent=0 // pred_check_branch
    %19 = sbr.rel (0) target = $region17
  $region16: #{tpu_custom_call.1} parent=0 // pred_region
    _
  $region17: #{tpu_custom_call.1} parent=0 // pred_fallthru
    _
  // Predicated region
  $region18: #{tpu_custom_call.1} parent=0 // pred_check
    _
  $region19: #{tpu_custom_call.1} parent=0 // pred_check_branch
    %21 = sbr.rel (0) target = $region21
  $region20: #{tpu_custom_call.1} parent=0 // pred_region
    _
  $region21: #{tpu_custom_call.1} parent=0 // pred_fallthru
    _
  // Predicated region
  $region22: #{tpu_custom_call.1} parent=0 // pred_check
    _
  $region23: #{tpu_custom_call.1} parent=0 // pred_check_branch
    %23 = sbr.rel (0) target = $region25
  $region24: #{tpu_custom_call.1} parent=0 // pred_region
    _
  $region25: #{tpu_custom_call.1} parent=0 // pred_fallthru
    _
  // Predicated region
  $region26: #{tpu_custom_call.1} parent=0 // pred_check
    _
  $region27: #{tpu_custom_call.1} parent=0 // pred_check_branch
    %25 = sbr.rel (0) target = $region29
  $region28: #{tpu_custom_call.1} parent=0 // pred_region
    _
  $region29: #{tpu_custom_call.1} parent=0 // pred_fallthru
    _
  %v27 = vld [vmem:[%s0] sm:$0xf]
  %v28 = vld [vmem:[%s0 + $0x4] sm:$0xf]
  %v29 = vld [vmem:[%s0 + $0x8] sm:$0xf]
  %v30 = vld [vmem:[%s0 + $0xc] sm:$0xf]
  %v31 = vld [vmem:[%s0 + $0x10] sm:$0xf]
  %v32 = vld [vmem:[%s0 + $0x14] sm:$0xf]
  %v33 = vld [vmem:[%s0 + $0x18] sm:$0xf]
  %v34 = vld [vmem:[%s0 + $0x1c] sm:$0xf]
  %v35 = vld [vmem:[%s1] sm:$0xf]
  %v36 = vld [vmem:[%s1 + $0x4] sm:$0xf]
  %v37 = vld [vmem:[%s1 + $0x8] sm:$0xf]
  %v38 = vld [vmem:[%s1 + $0xc] sm:$0xf]
  %v39 = vld [vmem:[%s1 + $0x10] sm:$0xf]
  %v40 = vld [vmem:[%s2] sm:$0x1]
  %v42 = vlaneseq
  %v43 = vshrl.u32 %v42, 7
  %v44 = vsub.s32 0, %v43
  %v45 = vrot.slane %v40, %v44
  %v55 = vunpack.c.l.b16 %v27
  %v56 = vunpack.c.l.b16 %v28
  %v57 = vunpack.c.l.b16 %v29
  %v58 = vunpack.c.l.b16 %v30
  %v59 = vunpack.c.l.b16 %v31
  %v60 = vunpack.c.l.b16 %v32
  %v61 = vunpack.c.l.b16 %v33
  %v62 = vunpack.c.l.b16 %v34
  %v63 = vpack.c.b16 %v56, %v55
  %v64 = vpack.c.b16 %v58, %v57
  %v65 = vpack.c.b16 %v60, %v59
  %v66 = vpack.c.b16 %v62, %v61
  %v72 = vunpack.c.l.b16 %v35
  %v73 = vunpack.c.l.b16 %v36
  %v74 = vunpack.c.l.b16 %v37
  %v75 = vunpack.c.l.b16 %v38
  %v76 = vunpack.c.l.b16 %v39
  %v77 = vpack.c.b16 %v73, %v72
  %v78 = vpack.c.b16 %v75, %v74
  %v79 = vpack.c.b16 %v76, %v76
  %vm82 = vcmask 326656
  %v84 = vsel %vm82, %v63, 0
  %v87 = vsel %vm82, %v64, 0
  %v90 = vsel %vm82, %v65, 0
  %v93 = vsel %vm82, %v66, 0
  %vm95 = vcmask 1043456
  %v97 = vsel %vm95, %v79, 0
  %99 = vmatprep.subr.bf16.mxu0 0
  %100 = vmatpush1.bf16.msra.mxu0 %v77
  %101 = vmatprep.subr.bf16.mxu0 0
  %102 = vmatpush1.bf16.msra.mxu0 %v78
  %103 = vmatprep.subr.bf16.mxu0 0
  %104 = vmatpush1.bf16.msra.mxu0 %v97
  %105 = vmatprep.subr.bf16.mxu0 0
  %106 = vmatpush1.bf16.msra.mxu0 0
  %107 = vmatprep.subr.bf16.mxu0 0
  %108 = vmatpush1.bf16.msra.mxu0 0
  %109 = vmatprep.subr.bf16.mxu0 0
  %110 = vmatpush1.bf16.msra.mxu0 0
  %111 = vmatprep.subr.bf16.mxu0 0
  %112 = vmatpush1.bf16.msra.mxu0 0
  %113 = vmatprep.subr.bf16.mxu0 0
  %114 = vmatpush1.bf16.msra.mxu0 0
  %115 = vmatprep.subr.bf16.mxu0 0
  %116 = vmatpush1.bf16.msra.mxu0 0
  %117 = vmatprep.subr.bf16.mxu0 0
  %118 = vmatpush1.bf16.msra.mxu0 0
  %119 = vmatprep.subr.bf16.mxu0 0
  %120 = vmatpush1.bf16.msra.mxu0 0
  %121 = vmatprep.subr.bf16.mxu0 0
  %122 = vmatpush1.bf16.msra.mxu0 0
  %123 = vmatprep.subr.bf16.mxu0 0
  %124 = vmatpush1.bf16.msra.mxu0 0
  %125 = vmatprep.subr.bf16.mxu0 0
  %126 = vmatpush1.bf16.msra.mxu0 0
  %127 = vmatprep.subr.bf16.mxu0 0
  %128 = vmatpush1.bf16.msra.mxu0 0
  %129 = vmatprep.subr.bf16.mxu0 0
  %130 = vmatpush1.bf16.msra.mxu0 0
  %131 = vmatprep.mubr.bf16.mxu0 0
  %132 = vmatmul.mubr.bf16.gmra.mrb[0].mxu0 %v84
  %v133 = vpop.f32.mrb[0].mxu0
  %v134 = vadd.f32 %v45, %v133
  %v135 = vpop.f32.mrb[0].mxu0
  %v136 = vpop.f32.mrb[0].mxu0
  %v137 = vadd.f32 %v45, %v136
  %v138 = vpop.f32.mrb[0].mxu0
  %139 = vmatprep.mubr.bf16.mxu0 0
  %140 = vmatmul.mubr.bf16.gmra.mrb[0].mxu0 %v87
  %v141 = vpop.f32.mrb[0].mxu0
  %v142 = vadd.f32 %v45, %v141
  %v143 = vpop.f32.mrb[0].mxu0
  %v144 = vpop.f32.mrb[0].mxu0
  %v145 = vadd.f32 %v45, %v144
  %v146 = vpop.f32.mrb[0].mxu0
  %147 = vmatprep.mubr.bf16.mxu0 0
  %148 = vmatmul.mubr.bf16.gmra.mrb[0].mxu0 %v90
  %v149 = vpop.f32.mrb[0].mxu0
  %v150 = vadd.f32 %v45, %v149
  %v151 = vpop.f32.mrb[0].mxu0
  %v152 = vpop.f32.mrb[0].mxu0
  %v153 = vadd.f32 %v45, %v152
  %v154 = vpop.f32.mrb[0].mxu0
  %155 = vmatprep.mubr.bf16.mxu0 0
  %156 = vmatmul.mubr.bf16.gmra.mrb[0].mxu0 %v93
  %v157 = vpop.f32.mrb[0].mxu0
  %v158 = vadd.f32 %v45, %v157
  %v159 = vpop.f32.mrb[0].mxu0
  %v160 = vpop.f32.mrb[0].mxu0
  %v161 = vadd.f32 %v45, %v160
  %v162 = vpop.f32.mrb[0].mxu0
  %163 = vdwg.mxu0
  %v164 = vmax.f32 %v134, 0.0
  %v165 = vmax.f32 %v137, 0.0
  %v166 = vmax.f32 %v142, 0.0
  %v167 = vmax.f32 %v145, 0.0
  %v168 = vmax.f32 %v150, 0.0
  %v169 = vmax.f32 %v153, 0.0
  %v170 = vmax.f32 %v158, 0.0
  %v171 = vmax.f32 %v161, 0.0
  %v172 = vpack.c.bf16 %v165, %v164
  %v173 = vpack.c.bf16 %v167, %v166
  %v174 = vpack.c.bf16 %v169, %v168
  %v175 = vpack.c.bf16 %v171, %v170
  %v176 = vld [vmem:[%s3] sm:$0xf]
  %v177 = vld [vmem:[%s3 + $0x4] sm:$0xf]
  %v178 = vld [vmem:[%s3 + $0x8] sm:$0xf]
  %v179 = vld [vmem:[%s3 + $0xc] sm:$0xf]
  %v180 = vld [vmem:[%s3 + $0x10] sm:$0xf]
  %v181 = vld [vmem:[%s3 + $0x14] sm:$0xf]
  %v182 = vld [vmem:[%s3 + $0x18] sm:$0xf]
  %v183 = vld [vmem:[%s3 + $0x1c] sm:$0xf]
  %v184 = vld [vmem:[%s4] sm:$0x1]
  %v186 = vlaneseq
  %v187 = vshrl.u32 %v186, 7
  %v188 = vsub.s32 0, %v187
  %v189 = vrot.slane %v184, %v188
  %v199 = vunpack.c.l.b16 %v176
  %v200 = vunpack.c.l.b16 %v177
  %v201 = vunpack.c.l.b16 %v178
  %v202 = vunpack.c.l.b16 %v179
  %v203 = vunpack.c.l.b16 %v180
  %v204 = vunpack.c.l.b16 %v181
  %v205 = vunpack.c.l.b16 %v182
  %v206 = vunpack.c.l.b16 %v183
  %v207 = vpack.c.b16 %v200, %v199
  %v208 = vpack.c.b16 %v202, %v201
  %v209 = vpack.c.b16 %v204, %v203
  %v210 = vpack.c.b16 %v206, %v205
  %vm215 = vcmask 523264
  %v217 = vsel %vm215, %v172, 0
  %v220 = vsel %vm215, %v173, 0
  %v223 = vsel %vm215, %v174, 0
  %v226 = vsel %vm215, %v175, 0
  %228 = vmatprep.subr.bf16.mxu0 0
  %229 = vmatpush1.bf16.msra.mxu0 %v207
  %230 = vmatprep.subr.bf16.mxu0 0
  %231 = vmatpush1.bf16.msra.mxu0 %v208
  %232 = vmatprep.subr.bf16.mxu0 0
  %233 = vmatpush1.bf16.msra.mxu0 %v209
  %234 = vmatprep.subr.bf16.mxu0 0
  %235 = vmatpush1.bf16.msra.mxu0 %v210
  %236 = vmatprep.subr.bf16.mxu0 0
  %237 = vmatpush1.bf16.msra.mxu0 0
  %238 = vmatprep.subr.bf16.mxu0 0
  %239 = vmatpush1.bf16.msra.mxu0 0
  %240 = vmatprep.subr.bf16.mxu0 0
  %241 = vmatpush1.bf16.msra.mxu0 0
  %242 = vmatprep.subr.bf16.mxu0 0
  %243 = vmatpush1.bf16.msra.mxu0 0
  %244 = vmatprep.subr.bf16.mxu0 0
  %245 = vmatpush1.bf16.msra.mxu0 0
  %246 = vmatprep.subr.bf16.mxu0 0
  %247 = vmatpush1.bf16.msra.mxu0 0
  %248 = vmatprep.subr.bf16.mxu0 0
  %249 = vmatpush1.bf16.msra.mxu0 0
  %250 = vmatprep.subr.bf16.mxu0 0
  %251 = vmatpush1.bf16.msra.mxu0 0
  %252 = vmatprep.subr.bf16.mxu0 0
  %253 = vmatpush1.bf16.msra.mxu0 0
  %254 = vmatprep.subr.bf16.mxu0 0
  %255 = vmatpush1.bf16.msra.mxu0 0
  %256 = vmatprep.subr.bf16.mxu0 0
  %257 = vmatpush1.bf16.msra.mxu0 0
  %258 = vmatprep.subr.bf16.mxu0 0
  %259 = vmatpush1.bf16.msra.mxu0 0
  %260 = vmatprep.mubr.bf16.mxu0 0
  %261 = vmatmul.mubr.bf16.gmra.mrb[0].mxu0 %v217
  %v262 = vpop.f32.mrb[0].mxu0
  %v263 = vadd.f32 %v189, %v262
  %v264 = vpop.f32.mrb[0].mxu0
  %v265 = vpop.f32.mrb[0].mxu0
  %v266 = vadd.f32 %v189, %v265
  %v267 = vpop.f32.mrb[0].mxu0
  %268 = vmatprep.mubr.bf16.mxu0 0
  %269 = vmatmul.mubr.bf16.gmra.mrb[0].mxu0 %v220
  %v270 = vpop.f32.mrb[0].mxu0
  %v271 = vadd.f32 %v189, %v270
  %v272 = vpop.f32.mrb[0].mxu0
  %v273 = vpop.f32.mrb[0].mxu0
  %v274 = vadd.f32 %v189, %v273
  %v275 = vpop.f32.mrb[0].mxu0
  %276 = vmatprep.mubr.bf16.mxu0 0
  %277 = vmatmul.mubr.bf16.gmra.mrb[0].mxu0 %v223
  %v278 = vpop.f32.mrb[0].mxu0
  %v279 = vadd.f32 %v189, %v278
  %v280 = vpop.f32.mrb[0].mxu0
  %v281 = vpop.f32.mrb[0].mxu0
  %v282 = vadd.f32 %v189, %v281
  %v283 = vpop.f32.mrb[0].mxu0
  %284 = vmatprep.mubr.bf16.mxu0 0
  %285 = vmatmul.mubr.bf16.gmra.mrb[0].mxu0 %v226
  %v286 = vpop.f32.mrb[0].mxu0
  %v287 = vadd.f32 %v189, %v286
  %v288 = vpop.f32.mrb[0].mxu0
  %v289 = vpop.f32.mrb[0].mxu0
  %v290 = vadd.f32 %v189, %v289
  %v291 = vpop.f32.mrb[0].mxu0
  %292 = vdwg.mxu0
  %v293 = vmax.f32 %v263, 0.0
  %v294 = vmax.f32 %v266, 0.0
  %v295 = vmax.f32 %v271, 0.0
  %v296 = vmax.f32 %v274, 0.0
  %v297 = vmax.f32 %v279, 0.0
  %v298 = vmax.f32 %v282, 0.0
  %v299 = vmax.f32 %v287, 0.0
  %v300 = vmax.f32 %v290, 0.0
  %v301 = vpack.c.bf16 %v294, %v293
  %v302 = vpack.c.bf16 %v296, %v295
  %v303 = vpack.c.bf16 %v298, %v297
  %v304 = vpack.c.bf16 %v300, %v299
  %v305 = vld [vmem:[%s5] sm:$0xf]
  %v306 = vld [vmem:[%s5 + $0x4] sm:$0xf]
  %v307 = vld [vmem:[%s5 + $0x8] sm:$0xf]
  %v308 = vld [vmem:[%s5 + $0xc] sm:$0xf]
  %v309 = vld [vmem:[%s6] sm:$0x1]
  %v311 = vlaneseq
  %v312 = vshrl.u32 %v311, 7
  %v313 = vsub.s32 0, %v312
  %v314 = vrot.slane %v309, %v313
  %v320 = vunpack.c.l.b16 %v305
  %v321 = vunpack.c.l.b16 %v306
  %v322 = vunpack.c.l.b16 %v307
  %v323 = vunpack.c.l.b16 %v308
  %v324 = vpack.c.b16 %v321, %v320
  %v325 = vpack.c.b16 %v323, %v322
  %vm328 = vcmask 261120
  %v330 = vsel %vm328, %v301, 0
  %v333 = vsel %vm328, %v302, 0
  %v336 = vsel %vm328, %v303, 0
  %v339 = vsel %vm328, %v304, 0
  %341 = vmatprep.subr.bf16.mxu0 0
  %342 = vmatpush1.bf16.msra.mxu0 %v324
  %343 = vmatprep.subr.bf16.mxu0 0
  %344 = vmatpush1.bf16.msra.mxu0 %v325
  %345 = vmatprep.subr.bf16.mxu0 0
  %346 = vmatpush1.bf16.msra.mxu0 0
  %347 = vmatprep.subr.bf16.mxu0 0
  %348 = vmatpush1.bf16.msra.mxu0 0
  %349 = vmatprep.subr.bf16.mxu0 0
  %350 = vmatpush1.bf16.msra.mxu0 0
  %351 = vmatprep.subr.bf16.mxu0 0
  %352 = vmatpush1.bf16.msra.mxu0 0
  %353 = vmatprep.subr.bf16.mxu0 0
  %354 = vmatpush1.bf16.msra.mxu0 0
  %355 = vmatprep.subr.bf16.mxu0 0
  %356 = vmatpush1.bf16.msra.mxu0 0
  %357 = vmatprep.subr.bf16.mxu0 0
  %358 = vmatpush1.bf16.msra.mxu0 0
  %359 = vmatprep.subr.bf16.mxu0 0
  %360 = vmatpush1.bf16.msra.mxu0 0
  %361 = vmatprep.subr.bf16.mxu0 0
  %362 = vmatpush1.bf16.msra.mxu0 0
  %363 = vmatprep.subr.bf16.mxu0 0
  %364 = vmatpush1.bf16.msra.mxu0 0
  %365 = vmatprep.subr.bf16.mxu0 0
  %366 = vmatpush1.bf16.msra.mxu0 0
  %367 = vmatprep.subr.bf16.mxu0 0
  %368 = vmatpush1.bf16.msra.mxu0 0
  %369 = vmatprep.subr.bf16.mxu0 0
  %370 = vmatpush1.bf16.msra.mxu0 0
  %371 = vmatprep.subr.bf16.mxu0 0
  %372 = vmatpush1.bf16.msra.mxu0 0
  %373 = vmatprep.mubr.bf16.mxu0 0
  %374 = vmatmul.mubr.bf16.gmra.mrb[0].mxu0 %v330
  %v375 = vpop.f32.mrb[0].mxu0
  %v376 = vadd.f32 %v314, %v375
  %v377 = vpop.f32.mrb[0].mxu0
  %v378 = vpop.f32.mrb[0].mxu0
  %v379 = vadd.f32 %v314, %v378
  %v380 = vpop.f32.mrb[0].mxu0
  %381 = vmatprep.mubr.bf16.mxu0 0
  %382 = vmatmul.mubr.bf16.gmra.mrb[0].mxu0 %v333
  %v383 = vpop.f32.mrb[0].mxu0
  %v384 = vadd.f32 %v314, %v383
  %v385 = vpop.f32.mrb[0].mxu0
  %v386 = vpop.f32.mrb[0].mxu0
  %v387 = vadd.f32 %v314, %v386
  %v388 = vpop.f32.mrb[0].mxu0
  %389 = vmatprep.mubr.bf16.mxu0 0
  %390 = vmatmul.mubr.bf16.gmra.mrb[0].mxu0 %v336
  %v391 = vpop.f32.mrb[0].mxu0
  %v392 = vadd.f32 %v314, %v391
  %v393 = vpop.f32.mrb[0].mxu0
  %v394 = vpop.f32.mrb[0].mxu0
  %v395 = vadd.f32 %v314, %v394
  %v396 = vpop.f32.mrb[0].mxu0
  %397 = vmatprep.mubr.bf16.mxu0 0
  %398 = vmatmul.mubr.bf16.gmra.mrb[0].mxu0 %v339
  %v399 = vpop.f32.mrb[0].mxu0
  %v400 = vadd.f32 %v314, %v399
  %v401 = vpop.f32.mrb[0].mxu0
  %v402 = vpop.f32.mrb[0].mxu0
  %v403 = vadd.f32 %v314, %v402
  %v404 = vpop.f32.mrb[0].mxu0
  %405 = vdwg.mxu0
  %vm406 = vcmask 80896
  %407 = vst.msk [vmem:[%s7] sm:$0xff] %vm406, %v376
  %408 = vst.msk [vmem:[%s7 + $0x8] sm:$0xff] %vm406, %v379
  %409 = vst.msk [vmem:[%s7 + $0x10] sm:$0xff] %vm406, %v384
  %410 = vst.msk [vmem:[%s7 + $0x18] sm:$0xff] %vm406, %v387
  %411 = vst.msk [vmem:[%s7 + $0x20] sm:$0xff] %vm406, %v392
  %412 = vst.msk [vmem:[%s7 + $0x28] sm:$0xff] %vm406, %v395
  %413 = vst.msk [vmem:[%s7 + $0x30] sm:$0xff] %vm406, %v400
  %414 = vst.msk [vmem:[%s7 + $0x38] sm:$0xff] %vm406, %v403
  // Predicated region
  $region30: #{tpu_custom_call.1} parent=0 // pred_check
    _
  $region31: #{tpu_custom_call.1} parent=0 // pred_check_branch
    %416 = sbr.rel (0) target = $region33
  $region32: #{tpu_custom_call.1} parent=0 // pred_region
    _
  $region33: #{tpu_custom_call.1} parent=0 // pred_fallthru
    _
  // Predicated region
  $region34: #{tpu_custom_call.1} parent=0 // pred_check
    _
  $region35: #{tpu_custom_call.1} parent=0 // pred_check_branch
    %418 = sbr.rel (0) target = $region37
  $region36: #{tpu_custom_call.1} parent=0 // pred_region
    _
  $region37: #{tpu_custom_call.1} parent=0 // pred_fallthru
    _

</llo_original>
